<compile_context>
chip_gen: v7x
topology: tpu7x:2x2x1
jax: 0.10.0
libtpu: 0.0.40
codegen_flags: <defaults>
</compile_context>

<pallas_src>
import jax
import jax.numpy as jnp
from jax import lax
from jax.experimental import pallas as pl
from jax.experimental.pallas import tpu as pltpu

EPS = 1e-5  # BatchNorm1d eps


def _round_up(a, b):
    return (a + b - 1) // b * b


def _row_tiling(n, tile_n):
    """Return (tile, num_tiles) for the node/edge row stream.

    The row tile is the lane dim of the transposed logits block, so for
    multi-tile grids it must be a multiple of 128 (lane-dense unmasked
    stores).  Small inputs get one full-size tile (block == array shape, no
    divisibility requirement).  The tile is also capped so the 'parallel'
    grid axis has >= ~4 iterations (both TensorCores busy on 2-TC chips).
    """
    if n <= 128:
        return n, 1
    target = max(128, _round_up(pl.cdiv(n, 4), 128))
    tile = max(128, min(_round_up(tile_n, 128), target))
    return tile, pl.cdiv(n, tile)


# ----------------------------------------------------------------------------
# Pallas kernels
# ----------------------------------------------------------------------------
def _fused_forward_kernel(x_ref, wv_ref, bv_ref, w0_ref, b0_ref,
                          w1t_ref, b1t_ref, o_ref):
    """Fused AMLSimNet forward for one row-tile of nodes.

    x_ref   : (TILE_N, vertex_in)  streamed
    wv_ref  : (vertex_in, V)       resident (BN folded in)
    bv_ref  : (1, V)               resident
    w0_ref  : (V, V)               resident (predict0, BN + graph-loop folded)
    b0_ref  : (1, V)               resident
    w1t_ref : (C_pad, V)           resident (predict1, transposed, class-pad 8)
    b1t_ref : (C_pad, 1)           resident
    o_ref   : (C_pad, TILE_N)      streamed (transposed, lane-dense logits)
    """
    # vertex_linear: Linear(+folded BN) + ReLU  (Dropout is a no-op in eval)
    xf = jnp.dot(x_ref[...], wv_ref[...], preferred_element_type=jnp.float32)
    xf = jnp.maximum(xf + bv_ref[...], 0.0)

    # predict0 with the 'concat' aggregation and the (identity-stand-in)
    # graph-layer loop already folded into w0_ref on the host; bias + ReLU.
    p = jnp.dot(xf.astype(w0_ref.dtype), w0_ref[...],
                preferred_element_type=jnp.float32)
    p = jnp.maximum(p + b0_ref[...], 0.0)

    # predict1, emitted transposed: (C_pad, TILE_N) = W1^T . p^T, so the row
    # axis sits on lanes and stores stay dense without padding classes to 128.
    o_ref[...] = lax.dot_general(
        w1t_ref[...], p.astype(w1t_ref.dtype),
        dimension_numbers=(((1,), (1,)), ((), ())),
        preferred_element_type=jnp.float32) + b1t_ref[...]


def _linear_relu_kernel(x_ref, w_ref, b_ref, o_ref):
    # Linear(+folded BN) + ReLU, row-tiled.  Used only by the (gated-off)
    # edge branch, kept for structural fidelity with the PyTorch module.
    y = jnp.dot(x_ref[...], w_ref[...], preferred_element_type=jnp.float32)
    o_ref[...] = jnp.maximum(y + b_ref[...], 0.0)


# ----------------------------------------------------------------------------
# pallas_call wrappers
# ----------------------------------------------------------------------------
def edge_linear_relu(e, w, b, *, tile_n=2048, dot_dtype=jnp.float32):
    m, f_in = e.shape
    f_out = w.shape[1]
    if dot_dtype != jnp.float32:
        e = e.astype(dot_dtype)
        w = w.astype(dot_dtype)
    tile, num_tiles = _row_tiling(m, tile_n)
    return pl.pallas_call(
        _linear_relu_kernel,
        out_shape=jax.ShapeDtypeStruct((m, f_out), jnp.float32),
        grid=(num_tiles,),
        in_specs=[pl.BlockSpec((tile, f_in), lambda i: (i, 0)),
                  pl.BlockSpec(w.shape, lambda i: (0, 0)),
                  pl.BlockSpec(b.shape, lambda i: (0, 0))],
        out_specs=pl.BlockSpec((tile, f_out), lambda i: (i, 0)),
        compiler_params=pltpu.CompilerParams(
            dimension_semantics=("parallel",),
            vmem_limit_bytes=32 * 1024 * 1024),
    )(e, w, b)


def amlsim_forward(params, x, edge_attr, edge_index, *, num_layers,
                   tile_n=2048, dot_dtype=jnp.float32,
                   include_edge_branch=False):
    """Fused forward.

    tile_n   : default 2048 rows; total VMEM footprint is < 4 MiB at that
               size, so it is safe on every generation.  It is automatically
               capped so the row grid keeps >= ~4 iterations (megacore).
    dot_dtype: jnp.bfloat16 halves the x DMA stream and resident weight VMEM
               (weights/x are pre-cast on the host, accumulation stays f32);
               keep f32 for bit fidelity with the PyTorch reference.
    """
    del edge_index  # unused: identity edge module + identity vertex stand-in

    wv, bv = params["vertex_linear"]          # (F_in, V), (1, V)   BN folded
    w0s, b0 = params["predict0"]              # (L+1, V, V), (1, V) BN folded
    w1, b1 = params["predict1"]               # (V, C), (C,)
    num_classes = w1.shape[1]

    n, f_in = x.shape
    v = wv.shape[1]
    c_pad = _round_up(max(num_classes, 1), 8)

    # Fold the (identity-stand-in) graph-layer loop + 'concat' aggregation
    # into one effective predict0 weight: h_o_k = 2^k * xf, so
    #   cat([xf, h_o_0..h_o_{L-1}]) @ W0 == xf @ (W0_0 + sum_k 2^k * W0_{k+1}).
    # TODO(synk): revert to per-block accumulation once real mgcn/EGAT/nnconv
    # vertex modules replace the identity stand-in.
    scales = jnp.concatenate(
        [jnp.ones((1,), jnp.float32),
         2.0 ** jnp.arange(num_layers, dtype=jnp.float32)])
    w0_eff = jnp.einsum("k,kij->ij", scales, w0s)

    # predict1, transposed and sublane-padded to c_pad rows: logits come out
    # of the kernel as (C_pad, N) so stores are lane-dense along the node axis.
    w1t = jnp.zeros((c_pad, v), jnp.float32).at[:num_classes].set(w1.T)
    b1t = jnp.zeros((c_pad, 1), jnp.float32).at[:num_classes, 0].set(b1)

    if dot_dtype != jnp.float32:
        # Host-side pre-cast: no per-tile VPU casts of resident weights and a
        # halved x input stream.  Accumulation stays f32 inside the kernel.
        x = x.astype(dot_dtype)
        wv = wv.astype(dot_dtype)
        w0_eff = w0_eff.astype(dot_dtype)
        w1t = w1t.astype(dot_dtype)

    tile, num_tiles = _row_tiling(n, tile_n)

    rowmap = lambda i: (i, 0)
    colmap = lambda i: (0, i)
    const = lambda i: (0, 0)

    logits_t = pl.pallas_call(
        _fused_forward_kernel,
        out_shape=jax.ShapeDtypeStruct((c_pad, n), jnp.float32),
        grid=(num_tiles,),
        in_specs=[
            pl.BlockSpec((tile, f_in), rowmap),   # x: streamed row tiles
            pl.BlockSpec(wv.shape, const),        # weights: VMEM-resident
            pl.BlockSpec(bv.shape, const),
            pl.BlockSpec(w0_eff.shape, const),
            pl.BlockSpec(b0.shape, const),
            pl.BlockSpec(w1t.shape, const),
            pl.BlockSpec(b1t.shape, const),
        ],
        out_specs=pl.BlockSpec((c_pad, tile), colmap),
        compiler_params=pltpu.CompilerParams(
            dimension_semantics=("parallel",),    # shard row tiles across TCs
            vmem_limit_bytes=32 * 1024 * 1024),
    )(x, wv, bv, w0_eff, b0, w1t, b1t)

    # Tiny (C, N) -> (N, C) fix-up; ~num_classes*4 B/row each way.
    logits = logits_t[:num_classes].T

    if include_edge_branch:
        # Structural fidelity only: with edge_type='identity' and the identity
        # vertex stand-in, edge features can never reach the logits, so this
        # is dead work and gated off by default.
        _ = edge_linear_relu(edge_attr, *params["edge_linear"],
                             tile_n=tile_n, dot_dtype=dot_dtype)
    return logits


# ----------------------------------------------------------------------------
# Deterministic parameter construction (shapes from AMLSimNet.__init__),
# with eval-mode BatchNorm folded into the Linear weights/biases.
# ----------------------------------------------------------------------------
def _fold_bn_into_linear(w, b, gamma, beta, mean, var):
    # BN(x @ W + b) == x @ (W * s) + (b * s + t),
    #   s = gamma / sqrt(var + eps),  t = beta - mean * s
    s = gamma / jnp.sqrt(var + EPS)
    t = beta - mean * s
    return w * s[None, :], (b * s + t)[None, :]


def _make_linear_bn_folded(key, in_f, out_f):
    k_w, k_b, k_g, k_be, k_m, k_v = jax.random.split(key, 6)
    w = 0.1 * jax.random.normal(k_w, (in_f, out_f), jnp.float32)
    b = 0.05 * jax.random.normal(k_b, (out_f,), jnp.float32)
    gamma = 1.0 + 0.1 * jax.random.normal(k_g, (out_f,), jnp.float32)
    beta = 0.1 * jax.random.normal(k_be, (out_f,), jnp.float32)
    mean = 0.1 * jax.random.normal(k_m, (out_f,), jnp.float32)
    var = 0.5 + jax.random.uniform(k_v, (out_f,), jnp.float32)
    return _fold_bn_into_linear(w, b, gamma, beta, mean, var)


def make_params(key, vertex_in, edge_in, vertex_feature, edge_feature,
                num_layers, num_classes):
    k1, k2, k3, k4, k5 = jax.random.split(key, 5)
    predict_in = (num_layers + 1) * vertex_feature  # layer_aggregation='concat'

    w0, b0 = _make_linear_bn_folded(k3, predict_in, vertex_feature)
    # Keep predict0 as per-concat-block slabs (L+1, V, V); the forward folds
    # them into one effective weight (valid for the identity stand-in).
    w0s = w0.reshape(num_layers + 1, vertex_feature, vertex_feature)

    w1 = 0.1 * jax.random.normal(k4, (vertex_feature, num_classes), jnp.float32)
    b1 = 0.05 * jax.random.normal(k5, (num_classes,), jnp.float32)

    return {
        "vertex_linear": _make_linear_bn_folded(k1, vertex_in, vertex_feature),
        "edge_linear": _make_linear_bn_folded(k2, edge_in, edge_feature),
        "predict0": (w0s, b0),
        "predict1": (w1, b1),
    }


# ----------------------------------------------------------------------------
# Pure-JAX reference of the same (identity-stand-in) forward, for checking.
# ----------------------------------------------------------------------------
def _reference_forward(params, x, num_layers):
    wv, bv = params["vertex_linear"]
    w0s, b0 = params["predict0"]
    w1, b1 = params["predict1"]
    v = wv.shape[1]
    xf = jnp.maximum(x @ wv + bv, 0.0)
    h_outputs = [xf]
    x_cur = xf
    x_hidden = xf
    for _ in range(num_layers):
        h_o = x_cur                      # identity vertex-module stand-in
        x_new = x_hidden + h_o           # ResidualAgg(hidden, new)
        x_cur = x_hidden = x_new
        h_outputs.append(h_o)
    h = jnp.concatenate(h_outputs, axis=-1)
    w0 = w0s.reshape((num_layers + 1) * v, v)
    p = jnp.maximum(h @ w0 + b0, 0.0)
    return p @ w1 + b1


# ----------------------------------------------------------------------------
if __name__ == "__main__":
    key = jax.random.PRNGKey(0)
    k_x, k_e, k_idx, k_p = jax.random.split(key, 4)

    # Small, module-consistent shapes.
    NUM_NODES = 16
    NUM_EDGES = 32
    VERTEX_IN = 16
    EDGE_IN = 8
    VERTEX_FEATURE = 32
    EDGE_FEATURE = 32
    NUM_CLASSES = 4
    NUM_LAYERS = 2

    x = jax.random.normal(k_x, (NUM_NODES, VERTEX_IN), jnp.float32)
    edge_attr = jax.random.normal(k_e, (NUM_EDGES, EDGE_IN), jnp.float32)
    edge_index = jax.random.randint(k_idx, (2, NUM_EDGES), 0, NUM_NODES,
                                    dtype=jnp.int32)

    params = make_params(k_p, VERTEX_IN, EDGE_IN, VERTEX_FEATURE, EDGE_FEATURE,
                         NUM_LAYERS, NUM_CLASSES)

    logits = amlsim_forward(params, x, edge_attr, edge_index,
                            num_layers=NUM_LAYERS)
    logits = jax.block_until_ready(logits)

    assert logits.shape == (NUM_NODES, NUM_CLASSES), logits.shape
    assert logits.dtype == jnp.float32

    ref = _reference_forward(params, x, NUM_LAYERS)
    assert jnp.allclose(logits, ref, atol=1e-3, rtol=1e-3), \
        float(jnp.max(jnp.abs(logits - ref)))

    print("KERNEL_OK")
</pallas_src>

<mosaic_0001>
module attributes {stable_mosaic.version = 11 : i64} {
  func.func @_fused_forward_kernel(%arg0: i32, %arg1: memref<16x16xf32, #tpu.memory_space<vmem>>, %arg2: memref<16x32xf32, #tpu.memory_space<vmem>>, %arg3: memref<1x32xf32, #tpu.memory_space<vmem>>, %arg4: memref<32x32xf32, #tpu.memory_space<vmem>>, %arg5: memref<1x32xf32, #tpu.memory_space<vmem>>, %arg6: memref<8x32xf32, #tpu.memory_space<vmem>>, %arg7: memref<8x1xf32, #tpu.memory_space<vmem>>, %arg8: memref<8x16xf32, #tpu.memory_space<vmem>>) attributes {dimension_semantics = [#tpu.dimension_semantics<parallel>], iteration_bounds = array<i64: 1>, scalar_prefetch = 0 : i64, scratch_operands = 0 : i64, tpu.core_type = #tpu.core_type<tc>, window_params = [{transform_indices = @transform_0, window_bounds = array<i64: 16, 16>}, {pipeline_mode = #tpu.pipeline_mode<synchronous>, transform_indices = @transform_1, window_bounds = array<i64: 16, 32>}, {pipeline_mode = #tpu.pipeline_mode<synchronous>, transform_indices = @transform_2, window_bounds = array<i64: 1, 32>}, {pipeline_mode = #tpu.pipeline_mode<synchronous>, transform_indices = @transform_3, window_bounds = array<i64: 32, 32>}, {pipeline_mode = #tpu.pipeline_mode<synchronous>, transform_indices = @transform_4, window_bounds = array<i64: 1, 32>}, {pipeline_mode = #tpu.pipeline_mode<synchronous>, transform_indices = @transform_5, window_bounds = array<i64: 8, 32>}, {pipeline_mode = #tpu.pipeline_mode<synchronous>, transform_indices = @transform_6, window_bounds = array<i64: 8, 1>}, {transform_indices = @transform_7, window_bounds = array<i64: 8, 16>}]} {
    %c0 = arith.constant 0 : index
    %c0_0 = arith.constant 0 : index
    %0 = vector.load %arg1[%c0, %c0_0] : memref<16x16xf32, #tpu.memory_space<vmem>>, vector<16x16xf32>
    %c0_1 = arith.constant 0 : index
    %c0_2 = arith.constant 0 : index
    %1 = vector.load %arg2[%c0_1, %c0_2] : memref<16x32xf32, #tpu.memory_space<vmem>>, vector<16x32xf32>
    %cst = arith.constant dense<0.000000e+00> : vector<16x32xf32>
    %2 = tpu.matmul %0, %1, %cst {dimension_numbers = #tpu.dot_dimension_numbers<[1], [0], [0], [1], [0, 0, 1, 1], [], []>} : vector<16x16xf32>, vector<16x32xf32>, vector<16x32xf32> -> vector<16x32xf32>
    %c0_3 = arith.constant 0 : index
    %c0_4 = arith.constant 0 : index
    %3 = vector.load %arg3[%c0_3, %c0_4] : memref<1x32xf32, #tpu.memory_space<vmem>>, vector<1x32xf32>
    %4 = vector.broadcast %3 : vector<1x32xf32> to vector<16x32xf32>
    %5 = arith.addf %2, %4 : vector<16x32xf32>
    %cst_5 = arith.constant 0.000000e+00 : f32
    %6 = vector.broadcast %cst_5 : f32 to vector<16x32xf32>
    %7 = arith.maximumf %5, %6 : vector<16x32xf32>
    %c0_6 = arith.constant 0 : index
    %c0_7 = arith.constant 0 : index
    %8 = vector.load %arg4[%c0_6, %c0_7] : memref<32x32xf32, #tpu.memory_space<vmem>>, vector<32x32xf32>
    %cst_8 = arith.constant dense<0.000000e+00> : vector<16x32xf32>
    %9 = tpu.matmul %7, %8, %cst_8 {dimension_numbers = #tpu.dot_dimension_numbers<[1], [0], [0], [1], [0, 0, 1, 1], [], []>} : vector<16x32xf32>, vector<32x32xf32>, vector<16x32xf32> -> vector<16x32xf32>
    %c0_9 = arith.constant 0 : index
    %c0_10 = arith.constant 0 : index
    %10 = vector.load %arg5[%c0_9, %c0_10] : memref<1x32xf32, #tpu.memory_space<vmem>>, vector<1x32xf32>
    %11 = vector.broadcast %10 : vector<1x32xf32> to vector<16x32xf32>
    %12 = arith.addf %9, %11 : vector<16x32xf32>
    %cst_11 = arith.constant 0.000000e+00 : f32
    %13 = vector.broadcast %cst_11 : f32 to vector<16x32xf32>
    %14 = arith.maximumf %12, %13 : vector<16x32xf32>
    %c0_12 = arith.constant 0 : index
    %c0_13 = arith.constant 0 : index
    %15 = vector.load %arg6[%c0_12, %c0_13] : memref<8x32xf32, #tpu.memory_space<vmem>>, vector<8x32xf32>
    %cst_14 = arith.constant dense<0.000000e+00> : vector<8x16xf32>
    %16 = tpu.matmul %15, %14, %cst_14 {dimension_numbers = #tpu.dot_dimension_numbers<[1], [1], [0], [0], [0, 0, 1, 0], [], []>} : vector<8x32xf32>, vector<16x32xf32>, vector<8x16xf32> -> vector<8x16xf32>
    %c0_15 = arith.constant 0 : index
    %c0_16 = arith.constant 0 : index
    %17 = vector.load %arg7[%c0_15, %c0_16] : memref<8x1xf32, #tpu.memory_space<vmem>>, vector<8x1xf32>
    %18 = vector.broadcast %17 : vector<8x1xf32> to vector<8x16xf32>
    %19 = arith.addf %16, %18 : vector<8x16xf32>
    %c0_17 = arith.constant 0 : index
    %c0_18 = arith.constant 0 : index
    %20 = vector.load %arg8[%c0_17, %c0_18] : memref<8x16xf32, #tpu.memory_space<vmem>>, vector<8x16xf32>
    tpu.vector_store %arg8[%c0_17, %c0_18], %19 {strides = array<i32>} : memref<8x16xf32, #tpu.memory_space<vmem>>, vector<8x16xf32>,
    return
  }
  func.func @transform_0(%arg0: i32) -> (i32, i32) {
    %c0_i32 = arith.constant 0 : i32
    %c0_i32_0 = arith.constant 0 : i32
    return %arg0, %c0_i32 : i32, i32
  }
  func.func @transform_1(%arg0: i32) -> (i32, i32) {
    %c0_i32 = arith.constant 0 : i32
    %c0_i32_0 = arith.constant 0 : i32
    %c0_i32_1 = arith.constant 0 : i32
    return %c0_i32, %c0_i32_0 : i32, i32
  }
  func.func @transform_2(%arg0: i32) -> (i32, i32) {
    %c0_i32 = arith.constant 0 : i32
    %c0_i32_0 = arith.constant 0 : i32
    %c0_i32_1 = arith.constant 0 : i32
    return %c0_i32, %c0_i32_0 : i32, i32
  }
  func.func @transform_3(%arg0: i32) -> (i32, i32) {
    %c0_i32 = arith.constant 0 : i32
    %c0_i32_0 = arith.constant 0 : i32
    %c0_i32_1 = arith.constant 0 : i32
    return %c0_i32, %c0_i32_0 : i32, i32
  }
  func.func @transform_4(%arg0: i32) -> (i32, i32) {
    %c0_i32 = arith.constant 0 : i32
    %c0_i32_0 = arith.constant 0 : i32
    %c0_i32_1 = arith.constant 0 : i32
    return %c0_i32, %c0_i32_0 : i32, i32
  }
  func.func @transform_5(%arg0: i32) -> (i32, i32) {
    %c0_i32 = arith.constant 0 : i32
    %c0_i32_0 = arith.constant 0 : i32
    %c0_i32_1 = arith.constant 0 : i32
    return %c0_i32, %c0_i32_0 : i32, i32
  }
  func.func @transform_6(%arg0: i32) -> (i32, i32) {
    %c0_i32 = arith.constant 0 : i32
    %c0_i32_0 = arith.constant 0 : i32
    %c0_i32_1 = arith.constant 0 : i32
    return %c0_i32, %c0_i32_0 : i32, i32
  }
  func.func @transform_7(%arg0: i32) -> (i32, i32) {
    %c0_i32 = arith.constant 0 : i32
    %c0_i32_0 = arith.constant 0 : i32
    return %c0_i32, %arg0 : i32, i32
  }
}

</mosaic_0001>

<llo_original>
// kernel: tpu_custom_call.1
$region0: #{tpu_custom_call.1}
  #allocation0 [shape = 'u32[]', space=smem, size = 0x4, offset = 0x4, fixed_abs, tag = 'smem constant byte address 0x4 - core index']
  #allocation1 [shape = 'u32[144,128]{1,0:T(1,128)}', space=vmem, size = 0x12000, scoped, tag = 'internal scratch']
  %s0 = inlined_call_operand.hbm [shape: f32[16,16], index: 0, kind: input, shape index: {}]
  %s1 = inlined_call_operand.hbm [shape: f32[16,32], index: 1, kind: input, shape index: {}]
  %s2 = inlined_call_operand.vmem [shape: f32[1,32], index: 2, kind: input, shape index: {}]
  %s3 = inlined_call_operand.hbm [shape: f32[32,32], index: 3, kind: input, shape index: {}]
  %s4 = inlined_call_operand.vmem [shape: f32[1,32], index: 4, kind: input, shape index: {}]
  %s5 = inlined_call_operand.vmem [shape: f32[8,32], index: 5, kind: input, shape index: {}]
  %s6 = inlined_call_operand.vmem [shape: f32[8,1], index: 6, kind: input, shape index: {}]
  %s7 = inlined_call_operand.hbm [shape: f32[8,16], index: 7, kind: output, shape index: {}]
  %s8 = sld [smem:[#allocation0]]
  $region50: #{tpu_custom_call.1} parent=0
    _
  %s10 = ssub.s32 1, %s8
  %s11 = scalar_select 0, %s10, %s8
  $region1: #{tpu_custom_call.1} parent=0
    #allocation2 [shape = 'u8[8192]{0}', space=vmem, size = 0x2000, scoped, tag = 'input window, operand 0, single buffered']
    #allocation3 [shape = 's32[1]{0}', space=sflag, size = 0x4, scoped, tag = 'scoped memory for tpu_custom_call.1']
    #allocation4 [shape = 's32[1]{0}', space=sflag, size = 0x4, scoped, tag = 'scoped memory for tpu_custom_call.1']
    #allocation5 [shape = 'u8[8192]{0}', space=vmem, size = 0x2000, scoped, tag = 'input window, operand 1, single buffered']
    #allocation6 [shape = 's32[1]{0}', space=sflag, size = 0x4, scoped, tag = 'scoped memory for tpu_custom_call.1']
    #allocation7 [shape = 'u8[16384]{0}', space=vmem, size = 0x4000, scoped, tag = 'input window, operand 3, single buffered']
    #allocation8 [shape = 'u8[4096]{0}', space=vmem, size = 0x1000, scoped, tag = 'output window, operand 0, single buffered']
    %12 = vsyncpa [#allocation3], 0
    %13 = vsyncpa [#allocation6], 0
    %14 = vsyncpa [#allocation4], 0
    // Predicated region
    $region2: #{tpu_custom_call.1} parent=1 // pred_check
      _
    $region3: #{tpu_custom_call.1} parent=1 // pred_check_branch
      %16 = sbr.rel (0) target = $region5
    $region4: #{tpu_custom_call.1} parent=1 // pred_region
      %s18 = ssub.s32 256, 256
      %19 = vsyncadd [#allocation3], %s18
      %s20 = sshll.u32 [#allocation2], 4
      %s21 = int_to_ptr.vmem [resolvable:$true] %s20
      %26 = dma.hbm_to_vmem [thread:$0]  %s0, 256, %s21, [#allocation3], 128, 128, 8
    $region5: #{tpu_custom_call.1} parent=1 // pred_fallthru
      _
    // Predicated region
    $region6: #{tpu_custom_call.1} parent=1 // pred_check
      _
    $region7: #{tpu_custom_call.1} parent=1 // pred_check_branch
      %28 = sbr.rel (0) target = $region9
    $region8: #{tpu_custom_call.1} parent=1 // pred_region
      %s30 = ssub.s32 256, 256
      %31 = vsyncadd [#allocation6], %s30
      %s32 = sshll.u32 [#allocation5], 4
      %s33 = int_to_ptr.vmem [resolvable:$true] %s32
      %38 = dma.hbm_to_vmem [thread:$0]  %s1, 256, %s33, [#allocation6], 128, 128, 8
    $region9: #{tpu_custom_call.1} parent=1 // pred_fallthru
      _
    // Predicated region
    $region10: #{tpu_custom_call.1} parent=1 // pred_check
      _
    $region11: #{tpu_custom_call.1} parent=1 // pred_check_branch
      %40 = sbr.rel (0) target = $region13
    $region12: #{tpu_custom_call.1} parent=1 // pred_region
      _
    $region13: #{tpu_custom_call.1} parent=1 // pred_fallthru
      _
    // Predicated region
    $region14: #{tpu_custom_call.1} parent=1 // pred_check
      _
    $region15: #{tpu_custom_call.1} parent=1 // pred_check_branch
      %42 = sbr.rel (0) target = $region17
    $region16: #{tpu_custom_call.1} parent=1 // pred_region
      %s44 = ssub.s32 512, 512
      %45 = vsyncadd [#allocation6], %s44
      %s46 = sshll.u32 [#allocation7], 4
      %s47 = int_to_ptr.vmem [resolvable:$true] %s46
      %52 = dma.hbm_to_vmem [thread:$0]  %s3, 512, %s47, [#allocation6], 128, 128, 8
    $region17: #{tpu_custom_call.1} parent=1 // pred_fallthru
      _
    // Predicated region
    $region18: #{tpu_custom_call.1} parent=1 // pred_check
      _
    $region19: #{tpu_custom_call.1} parent=1 // pred_check_branch
      %54 = sbr.rel (0) target = $region21
    $region20: #{tpu_custom_call.1} parent=1 // pred_region
      _
    $region21: #{tpu_custom_call.1} parent=1 // pred_fallthru
      _
    // Predicated region
    $region22: #{tpu_custom_call.1} parent=1 // pred_check
      _
    $region23: #{tpu_custom_call.1} parent=1 // pred_check_branch
      %56 = sbr.rel (0) target = $region25
    $region24: #{tpu_custom_call.1} parent=1 // pred_region
      _
    $region25: #{tpu_custom_call.1} parent=1 // pred_fallthru
      _
    // Predicated region
    $region26: #{tpu_custom_call.1} parent=1 // pred_check
      _
    $region27: #{tpu_custom_call.1} parent=1 // pred_check_branch
      %58 = sbr.rel (0) target = $region29
    $region28: #{tpu_custom_call.1} parent=1 // pred_region
      _
    $region29: #{tpu_custom_call.1} parent=1 // pred_fallthru
      _
    // Predicated region
    $region30: #{tpu_custom_call.1} parent=1 // pred_check
      _
    $region31: #{tpu_custom_call.1} parent=1 // pred_check_branch
      %60 = sbr.rel (0) target = $region33
    $region32: #{tpu_custom_call.1} parent=1 // pred_region
      %61 = dma.done [#allocation3], 256
    $region33: #{tpu_custom_call.1} parent=1 // pred_fallthru
      _
    // Predicated region
    $region34: #{tpu_custom_call.1} parent=1 // pred_check
      _
    $region35: #{tpu_custom_call.1} parent=1 // pred_check_branch
      %63 = sbr.rel (0) target = $region37
    $region36: #{tpu_custom_call.1} parent=1 // pred_region
      %64 = dma.done [#allocation6], 256
    $region37: #{tpu_custom_call.1} parent=1 // pred_fallthru
      _
    // Predicated region
    $region38: #{tpu_custom_call.1} parent=1 // pred_check
      _
    $region39: #{tpu_custom_call.1} parent=1 // pred_check_branch
      %66 = sbr.rel (0) target = $region41
    $region40: #{tpu_custom_call.1} parent=1 // pred_region
      %67 = dma.done [#allocation6], 512
    $region41: #{tpu_custom_call.1} parent=1 // pred_fallthru
      _
    %v68 = vld [vmem:[#allocation2] sm:$0xff]
    %v69 = vld [vmem:[#allocation2 + $0x8] sm:$0xff]
    %v70 = vld [vmem:[#allocation5] sm:$0xff]
    %v71 = vld [vmem:[#allocation5 + $0x8] sm:$0xff]
    %v72 = vld [vmem:[%s2] sm:$0x1]
    %v74 = vlaneseq
    %v75 = vshrl.u32 %v74, 7
    %v76 = vsub.s32 0, %v75
    %v77 = vrot.slane %v72, %v76
    %vm79 = vcmask 130048
    %v81 = vsel %vm79, %v68, 0
    %v84 = vsel %vm79, %v69, 0
    %86 = vmatprep.subr.mxu0 0.0
    %87 = vmatpush1.msra.mxu0 %v70
    %88 = vmatprep.subr.mxu0 0.0
    %89 = vmatpush1.msra.mxu0 %v71
    %90 = vmatprep.subr.mxu0 0.0
    %91 = vmatpush1.msra.mxu0 0.0
    %92 = vmatprep.subr.mxu0 0.0
    %93 = vmatpush1.msra.mxu0 0.0
    %94 = vmatprep.subr.mxu0 0.0
    %95 = vmatpush1.msra.mxu0 0.0
    %96 = vmatprep.subr.mxu0 0.0
    %97 = vmatpush1.msra.mxu0 0.0
    %98 = vmatprep.subr.mxu0 0.0
    %99 = vmatpush1.msra.mxu0 0.0
    %100 = vmatprep.subr.mxu0 0.0
    %101 = vmatpush1.msra.mxu0 0.0
    %102 = vmatprep.subr.mxu0 0.0
    %103 = vmatpush1.msra.mxu0 0.0
    %104 = vmatprep.subr.mxu0 0.0
    %105 = vmatpush1.msra.mxu0 0.0
    %106 = vmatprep.subr.mxu0 0.0
    %107 = vmatpush1.msra.mxu0 0.0
    %108 = vmatprep.subr.mxu0 0.0
    %109 = vmatpush1.msra.mxu0 0.0
    %110 = vmatprep.subr.mxu0 0.0
    %111 = vmatpush1.msra.mxu0 0.0
    %112 = vmatprep.subr.mxu0 0.0
    %113 = vmatpush1.msra.mxu0 0.0
    %114 = vmatprep.subr.mxu0 0.0
    %115 = vmatpush1.msra.mxu0 0.0
    %116 = vmatprep.subr.mxu0 0.0
    %117 = vmatpush1.msra.mxu0 0.0
    %118 = vmatprep.subr.mxu0 0.0
    %119 = vmatpush1.msra.mxu0 0.0
    %120 = vmatprep.subr.mxu0 0.0
    %121 = vmatpush1.msra.mxu0 0.0
    %122 = vmatprep.subr.mxu0 0.0
    %123 = vmatpush1.msra.mxu0 0.0
    %124 = vmatprep.subr.mxu0 0.0
    %125 = vmatpush1.msra.mxu0 0.0
    %126 = vmatprep.subr.mxu0 0.0
    %127 = vmatpush1.msra.mxu0 0.0
    %128 = vmatprep.subr.mxu0 0.0
    %129 = vmatpush1.msra.mxu0 0.0
    %130 = vmatprep.subr.mxu0 0.0
    %131 = vmatpush1.msra.mxu0 0.0
    %132 = vmatprep.subr.mxu0 0.0
    %133 = vmatpush1.msra.mxu0 0.0
    %134 = vmatprep.subr.mxu0 0.0
    %135 = vmatpush1.msra.mxu0 0.0
    %136 = vmatprep.subr.mxu0 0.0
    %137 = vmatpush1.msra.mxu0 0.0
    %138 = vmatprep.subr.mxu0 0.0
    %139 = vmatpush1.msra.mxu0 0.0
    %140 = vmatprep.subr.mxu0 0.0
    %141 = vmatpush1.msra.mxu0 0.0
    %142 = vmatprep.subr.mxu0 0.0
    %143 = vmatpush1.msra.mxu0 0.0
    %144 = vmatprep.subr.mxu0 0.0
    %145 = vmatpush1.msra.mxu0 0.0
    %146 = vmatprep.subr.mxu0 0.0
    %147 = vmatpush1.msra.mxu0 0.0
    %148 = vmatprep.subr.mxu0 0.0
    %149 = vmatpush1.msra.mxu0 0.0
    %150 = vmatprep.mubr.f32.mxu0 0.0
    %151 = vmatmul.mubr.f32.gmra.mrb[0].mxu0 %v81
    %v152 = vpop.f32.mrb[0].mxu0
    %v153 = vadd.f32 %v77, %v152
    %v154 = vpop.f32.mrb[0].mxu0
    %155 = vmatprep.mubr.f32.mxu0 0.0
    %156 = vmatmul.mubr.f32.gmra.mrb[0].mxu0 %v84
    %v157 = vpop.f32.mrb[0].mxu0
    %v158 = vadd.f32 %v77, %v157
    %v159 = vpop.f32.mrb[0].mxu0
    %160 = vdwg.mxu0
    %v161 = vmax.f32 %v153, 0.0
    %v162 = vmax.f32 %v158, 0.0
    %v163 = vld [vmem:[#allocation7] sm:$0xff]
    %v164 = vld [vmem:[#allocation7 + $0x8] sm:$0xff]
    %v165 = vld [vmem:[#allocation7 + $0x10] sm:$0xff]
    %v166 = vld [vmem:[#allocation7 + $0x18] sm:$0xff]
    %v167 = vld [vmem:[%s4] sm:$0x1]
    %v169 = vlaneseq
    %v170 = vshrl.u32 %v169, 7
    %v171 = vsub.s32 0, %v170
    %v172 = vrot.slane %v167, %v171
    %vm174 = vcmask 261120
    %v176 = vsel %vm174, %v161, 0
    %v179 = vsel %vm174, %v162, 0
    %181 = vmatprep.subr.mxu0 0.0
    %182 = vmatpush1.msra.mxu0 %v163
    %183 = vmatprep.subr.mxu0 0.0
    %184 = vmatpush1.msra.mxu0 %v164
    %185 = vmatprep.subr.mxu0 0.0
    %186 = vmatpush1.msra.mxu0 %v165
    %187 = vmatprep.subr.mxu0 0.0
    %188 = vmatpush1.msra.mxu0 %v166
    %189 = vmatprep.subr.mxu0 0.0
    %190 = vmatpush1.msra.mxu0 0.0
    %191 = vmatprep.subr.mxu0 0.0
    %192 = vmatpush1.msra.mxu0 0.0
    %193 = vmatprep.subr.mxu0 0.0
    %194 = vmatpush1.msra.mxu0 0.0
    %195 = vmatprep.subr.mxu0 0.0
    %196 = vmatpush1.msra.mxu0 0.0
    %197 = vmatprep.subr.mxu0 0.0
    %198 = vmatpush1.msra.mxu0 0.0
    %199 = vmatprep.subr.mxu0 0.0
    %200 = vmatpush1.msra.mxu0 0.0
    %201 = vmatprep.subr.mxu0 0.0
    %202 = vmatpush1.msra.mxu0 0.0
    %203 = vmatprep.subr.mxu0 0.0
    %204 = vmatpush1.msra.mxu0 0.0
    %205 = vmatprep.subr.mxu0 0.0
    %206 = vmatpush1.msra.mxu0 0.0
    %207 = vmatprep.subr.mxu0 0.0
    %208 = vmatpush1.msra.mxu0 0.0
    %209 = vmatprep.subr.mxu0 0.0
    %210 = vmatpush1.msra.mxu0 0.0
    %211 = vmatprep.subr.mxu0 0.0
    %212 = vmatpush1.msra.mxu0 0.0
    %213 = vmatprep.subr.mxu0 0.0
    %214 = vmatpush1.msra.mxu0 0.0
    %215 = vmatprep.subr.mxu0 0.0
    %216 = vmatpush1.msra.mxu0 0.0
    %217 = vmatprep.subr.mxu0 0.0
    %218 = vmatpush1.msra.mxu0 0.0
    %219 = vmatprep.subr.mxu0 0.0
    %220 = vmatpush1.msra.mxu0 0.0
    %221 = vmatprep.subr.mxu0 0.0
    %222 = vmatpush1.msra.mxu0 0.0
    %223 = vmatprep.subr.mxu0 0.0
    %224 = vmatpush1.msra.mxu0 0.0
    %225 = vmatprep.subr.mxu0 0.0
    %226 = vmatpush1.msra.mxu0 0.0
    %227 = vmatprep.subr.mxu0 0.0
    %228 = vmatpush1.msra.mxu0 0.0
    %229 = vmatprep.subr.mxu0 0.0
    %230 = vmatpush1.msra.mxu0 0.0
    %231 = vmatprep.subr.mxu0 0.0
    %232 = vmatpush1.msra.mxu0 0.0
    %233 = vmatprep.subr.mxu0 0.0
    %234 = vmatpush1.msra.mxu0 0.0
    %235 = vmatprep.subr.mxu0 0.0
    %236 = vmatpush1.msra.mxu0 0.0
    %237 = vmatprep.subr.mxu0 0.0
    %238 = vmatpush1.msra.mxu0 0.0
    %239 = vmatprep.subr.mxu0 0.0
    %240 = vmatpush1.msra.mxu0 0.0
    %241 = vmatprep.subr.mxu0 0.0
    %242 = vmatpush1.msra.mxu0 0.0
    %243 = vmatprep.subr.mxu0 0.0
    %244 = vmatpush1.msra.mxu0 0.0
    %245 = vmatprep.mubr.f32.mxu0 0.0
    %246 = vmatmul.mubr.f32.gmra.mrb[0].mxu0 %v176
    %v247 = vpop.f32.mrb[0].mxu0
    %v248 = vadd.f32 %v172, %v247
    %v249 = vpop.f32.mrb[0].mxu0
    %250 = vmatprep.mubr.f32.mxu0 0.0
    %251 = vmatmul.mubr.f32.gmra.mrb[0].mxu0 %v179
    %v252 = vpop.f32.mrb[0].mxu0
    %v253 = vadd.f32 %v172, %v252
    %v254 = vpop.f32.mrb[0].mxu0
    %255 = vdwg.mxu0
    %v256 = vmax.f32 %v248, 0.0
    %v257 = vmax.f32 %v253, 0.0
    %v258 = vld [vmem:[%s5] sm:$0xff]
    %v259 = vld [vmem:[%s6] sm:$0xff]
    %261 = vset.pattern.permute.xlu0 0
    %262 = vperm.xlu0 %261, %v259
    %v263 = vpop.permute.xlu0 %262
    %v266 = vsel %vm174, %v258, 0
    %v269 = vsel %vm174, %v256, 0
    %v272 = vsel %vm174, %v257, 0
    %274 = vmatprep.subr.mxu0 0.0
    %275 = vmatpush1.xpose.msra.mxu0 %v269
    %276 = vmatprep.subr.mxu0 0.0
    %277 = vmatpush1.xpose.msra.mxu0 %v272
    %278 = vmatprep.subr.mxu0 0.0
    %279 = vmatpush1.xpose.msra.mxu0 0.0
    %280 = vmatprep.subr.mxu0 0.0
    %281 = vmatpush1.xpose.msra.mxu0 0.0
    %282 = vmatprep.subr.mxu0 0.0
    %283 = vmatpush1.xpose.msra.mxu0 0.0
    %284 = vmatprep.subr.mxu0 0.0
    %285 = vmatpush1.xpose.msra.mxu0 0.0
    %286 = vmatprep.subr.mxu0 0.0
    %287 = vmatpush1.xpose.msra.mxu0 0.0
    %288 = vmatprep.subr.mxu0 0.0
    %289 = vmatpush1.xpose.msra.mxu0 0.0
    %290 = vmatprep.subr.mxu0 0.0
    %291 = vmatpush1.xpose.msra.mxu0 0.0
    %292 = vmatprep.subr.mxu0 0.0
    %293 = vmatpush1.xpose.msra.mxu0 0.0
    %294 = vmatprep.subr.mxu0 0.0
    %295 = vmatpush1.xpose.msra.mxu0 0.0
    %296 = vmatprep.subr.mxu0 0.0
    %297 = vmatpush1.xpose.msra.mxu0 0.0
    %298 = vmatprep.subr.mxu0 0.0
    %299 = vmatpush1.xpose.msra.mxu0 0.0
    %300 = vmatprep.subr.mxu0 0.0
    %301 = vmatpush1.xpose.msra.mxu0 0.0
    %302 = vmatprep.subr.mxu0 0.0
    %303 = vmatpush1.xpose.msra.mxu0 0.0
    %304 = vmatprep.subr.mxu0 0.0
    %305 = vmatpush1.xpose.msra.mxu0 0.0
    %306 = vmatprep.subr.mxu0 0.0
    %307 = vmatpush1.xpose.msra.mxu0 0.0
    %308 = vmatprep.subr.mxu0 0.0
    %309 = vmatpush1.xpose.msra.mxu0 0.0
    %310 = vmatprep.subr.mxu0 0.0
    %311 = vmatpush1.xpose.msra.mxu0 0.0
    %312 = vmatprep.subr.mxu0 0.0
    %313 = vmatpush1.xpose.msra.mxu0 0.0
    %314 = vmatprep.subr.mxu0 0.0
    %315 = vmatpush1.xpose.msra.mxu0 0.0
    %316 = vmatprep.subr.mxu0 0.0
    %317 = vmatpush1.xpose.msra.mxu0 0.0
    %318 = vmatprep.subr.mxu0 0.0
    %319 = vmatpush1.xpose.msra.mxu0 0.0
    %320 = vmatprep.subr.mxu0 0.0
    %321 = vmatpush1.xpose.msra.mxu0 0.0
    %322 = vmatprep.subr.mxu0 0.0
    %323 = vmatpush1.xpose.msra.mxu0 0.0
    %324 = vmatprep.subr.mxu0 0.0
    %325 = vmatpush1.xpose.msra.mxu0 0.0
    %326 = vmatprep.subr.mxu0 0.0
    %327 = vmatpush1.xpose.msra.mxu0 0.0
    %328 = vmatprep.subr.mxu0 0.0
    %329 = vmatpush1.xpose.msra.mxu0 0.0
    %330 = vmatprep.subr.mxu0 0.0
    %331 = vmatpush1.xpose.msra.mxu0 0.0
    %332 = vmatprep.subr.mxu0 0.0
    %333 = vmatpush1.xpose.msra.mxu0 0.0
    %334 = vmatprep.subr.mxu0 0.0
    %335 = vmatpush1.xpose.msra.mxu0 0.0
    %336 = vmatprep.subr.mxu0 0.0
    %337 = vmatpush1.xpose.msra.mxu0 0.0
    %338 = vmatprep.mubr.f32.mxu0 0.0
    %339 = vmatmul.mubr.f32.gmra.mrb[0].mxu0 %v266
    %v340 = vpop.f32.mrb[0].mxu0
    %v341 = vadd.f32 %v263, %v340
    %v342 = vpop.f32.mrb[0].mxu0
    %343 = vdwg.mxu0
    %344 = vst.msk [vmem:[#allocation8] sm:$0xff] %vm79, %v341
    // Predicated region
    $region42: #{tpu_custom_call.1} parent=1 // pred_check
      _
    $region43: #{tpu_custom_call.1} parent=1 // pred_check_branch
      %346 = sbr.rel (0) target = $region45
    $region44: #{tpu_custom_call.1} parent=1 // pred_region
      %s348 = ssub.s32 128, 128
      %349 = vsyncadd [#allocation4], %s348
      %s351 = sshll.u32 [#allocation8], 4
      %s352 = int_to_ptr.vmem [resolvable:$true] %s351
      %354 = dma.vmem_to_hbm [thread:$0]  %s352, 128, %s7, [#allocation4]
    $region45: #{tpu_custom_call.1} parent=1 // pred_fallthru
      _
    // Predicated region
    $region46: #{tpu_custom_call.1} parent=1 // pred_check
      _
    $region47: #{tpu_custom_call.1} parent=1 // pred_check_branch
      %356 = sbr.rel (0) target = $region49
    $region48: #{tpu_custom_call.1} parent=1 // pred_region
      %357 = dma.done [#allocation4], 128
    $region49: #{tpu_custom_call.1} parent=1 // pred_fallthru
      _
    %358 = vsyncpa [#allocation3], 1
    %359 = vsyncpa [#allocation6], 1
    %360 = vsyncpa [#allocation4], 1

</llo_original>
